<compile_context>
chip_gen: v5e
topology: v5e:2x2
jax: 0.10.0
libtpu: 0.0.40
codegen_flags: <defaults>
</compile_context>

<pallas_src>
import jax
import jax.numpy as jnp
from jax import lax
from jax.experimental import pallas as pl
from jax.experimental.pallas import tpu as pltpu


def _gradloss_kernel(packed_ref, out_ref):
    # packed_ref: (2*n,) f32 in SMEM -> [losses | weights]
    # out_ref:    (1,)   f32 in SMEM
    n = packed_ref.shape[0] // 2  # static

    def body(i, acc):
        return acc + packed_ref[i] * packed_ref[n + i]

    # Scalar-core MAC; fully unrolled for small n_task (a handful of sld/smul/
    # sadd bundles), loop form kept for larger n_task to bound trace size.
    total = lax.fori_loop(0, n, body, jnp.float32(0.0), unroll=(n <= 64))
    out_ref[0] = total


def _gradloss_pallas(packed):
    n = packed.shape[0] // 2
    out = pl.pallas_call(
        _gradloss_kernel,
        out_shape=jax.ShapeDtypeStruct((1,), jnp.float32),
        in_specs=[pl.BlockSpec(memory_space=pltpu.MemorySpace.SMEM)],
        out_specs=pl.BlockSpec(memory_space=pltpu.MemorySpace.SMEM),
        cost_estimate=pl.CostEstimate(
            flops=2 * n, bytes_accessed=4 * (2 * n) + 4, transcendentals=0
        ),
    )(packed)
    return out[0]


def _forward(losses_vec, weights):
    # Pack into a single flat f32 vector so the kernel sees exactly one input.
    packed = jnp.concatenate(
        [
            losses_vec.astype(jnp.float32).reshape(-1),
            weights.astype(jnp.float32).reshape(-1),
        ]
    )
    return _gradloss_pallas(packed)


@jax.custom_vjp
def gradloss_apply(losses_vec, weights):
    return _forward(losses_vec, weights)


def _gradloss_fwd(losses_vec, weights):
    return _forward(losses_vec, weights), (losses_vec, weights)


def _gradloss_bwd(res, g):
    losses_vec, weights = res
    # Plain-XLA backward (two extra tiny Pallas launches would be pure
    # overhead).  Cotangent dtypes must match the primal input dtypes.
    d_losses = (g * weights).astype(losses_vec.dtype)
    d_weights = (g * losses_vec).astype(weights.dtype)
    return d_losses, d_weights


gradloss_apply.defvjp(_gradloss_fwd, _gradloss_bwd)


class GradLoss:
    """JAX/Pallas port of nevermore.layers.gradloss.GradLoss."""

    def __init__(self, alpha, n_task):
        self.alpha = alpha  # unused in forward (parity with torch)
        self.n_task = n_task
        # TODO(synk): torch.nn.Parameter training semantics — weights kept as a
        # plain f32 array attribute; to train them, pass weights explicitly to
        # gradloss_apply so they are a traced argument rather than a jit
        # constant.
        self.weights = jnp.ones((n_task,), dtype=jnp.float32)

    def __call__(self, losses):
        # Fast path: a pre-stacked (n_task,) vector (no per-call stacking work).
        # A list/tuple of scalar losses is also accepted for parity with the
        # torch forward signature and is stacked exactly once here.
        if isinstance(losses, (list, tuple)):
            losses_vec = jnp.stack(
                [jnp.asarray(l, jnp.float32).reshape(()) for l in losses]
            )
        else:
            losses_vec = jnp.asarray(losses, jnp.float32).reshape(self.n_task)
        return gradloss_apply(losses_vec, self.weights)


if __name__ == "__main__":
    n_task = 4
    key = jax.random.PRNGKey(0)
    raw = jax.random.uniform(key, (n_task,), dtype=jnp.float32) * 3.0

    module = GradLoss(alpha=0.5, n_task=n_task)

    # Pre-stacked fast path.
    total = jax.block_until_ready(module(raw))
    ref = jnp.sum(raw * module.weights)
    assert jnp.allclose(total, ref, rtol=1e-6, atol=1e-6), (total, ref)

    # List-of-scalars path (torch-signature parity).
    total_list = jax.block_until_ready(module([raw[i] for i in range(n_task)]))
    assert jnp.allclose(total_list, ref, rtol=1e-6, atol=1e-6), (total_list, ref)

    # Under jit (weights passed explicitly so they remain trainable inputs).
    total_jit = jax.block_until_ready(jax.jit(gradloss_apply)(raw, module.weights))
    assert jnp.allclose(total_jit, ref, rtol=1e-6, atol=1e-6), (total_jit, ref)

    # Autodiff through the Pallas call (custom_vjp).
    g_losses, g_weights = jax.grad(gradloss_apply, argnums=(0, 1))(raw, module.weights)
    g_losses = jax.block_until_ready(g_losses)
    assert jnp.allclose(g_losses, module.weights, rtol=1e-6, atol=1e-6)
    assert jnp.allclose(g_weights, raw, rtol=1e-6, atol=1e-6)

    print("KERNEL_OK")
</pallas_src>

<mosaic_0001>
module attributes {stable_mosaic.version = 11 : i64} {
  func.func @_gradloss_kernel(%arg0: memref<8xf32, #tpu.memory_space<smem>>, %arg1: memref<1xf32, #tpu.memory_space<smem>>) attributes {dimension_semantics = [], scalar_prefetch = 0 : i64, scratch_operands = 0 : i64, tpu.core_type = #tpu.core_type<tc>} {
    %cst = arith.constant 0.000000e+00 : f32
    %c0_i32 = arith.constant 0 : i32
    %0 = arith.index_cast %c0_i32 : i32 to index
    %1 = memref.load %arg0[%0] : memref<8xf32, #tpu.memory_space<smem>>
    %c4_i32 = arith.constant 4 : i32
    %2 = arith.addi %c4_i32, %c0_i32 : i32
    %3 = arith.index_cast %2 : i32 to index
    %4 = memref.load %arg0[%3] : memref<8xf32, #tpu.memory_space<smem>>
    %5 = arith.mulf %1, %4 : f32
    %6 = arith.addf %cst, %5 : f32
    %c1_i32 = arith.constant 1 : i32
    %7 = arith.index_cast %c1_i32 : i32 to index
    %8 = memref.load %arg0[%7] : memref<8xf32, #tpu.memory_space<smem>>
    %c4_i32_0 = arith.constant 4 : i32
    %9 = arith.addi %c4_i32_0, %c1_i32 : i32
    %10 = arith.index_cast %9 : i32 to index
    %11 = memref.load %arg0[%10] : memref<8xf32, #tpu.memory_space<smem>>
    %12 = arith.mulf %8, %11 : f32
    %13 = arith.addf %6, %12 : f32
    %c2_i32 = arith.constant 2 : i32
    %14 = arith.index_cast %c2_i32 : i32 to index
    %15 = memref.load %arg0[%14] : memref<8xf32, #tpu.memory_space<smem>>
    %c4_i32_1 = arith.constant 4 : i32
    %16 = arith.addi %c4_i32_1, %c2_i32 : i32
    %17 = arith.index_cast %16 : i32 to index
    %18 = memref.load %arg0[%17] : memref<8xf32, #tpu.memory_space<smem>>
    %19 = arith.mulf %15, %18 : f32
    %20 = arith.addf %13, %19 : f32
    %c3_i32 = arith.constant 3 : i32
    %21 = arith.index_cast %c3_i32 : i32 to index
    %22 = memref.load %arg0[%21] : memref<8xf32, #tpu.memory_space<smem>>
    %c4_i32_2 = arith.constant 4 : i32
    %23 = arith.addi %c4_i32_2, %c3_i32 : i32
    %24 = arith.index_cast %23 : i32 to index
    %25 = memref.load %arg0[%24] : memref<8xf32, #tpu.memory_space<smem>>
    %26 = arith.mulf %22, %25 : f32
    %27 = arith.addf %20, %26 : f32
    %c4_i32_3 = arith.constant 4 : i32
    %c0 = arith.constant 0 : index
    %28 = memref.load %arg1[%c0] : memref<1xf32, #tpu.memory_space<smem>>
    memref.store %27, %arg1[%c0] : memref<1xf32, #tpu.memory_space<smem>>
    return
  }
}

</mosaic_0001>

<llo_original>
// kernel: tpu_custom_call.1
$region0: #{tpu_custom_call.1}
  #allocation0 [shape = 'u32[]', space=smem, size = 0x4, offset = 0x4, fixed_abs, tag = 'smem constant byte address 0x4 - core index']
  #allocation1 [shape = 'u32[72,128]{1,0:T(1,128)}', space=vmem, size = 0x9000, scoped, tag = 'internal scratch']
  %s0 = inlined_call_operand.hbm [shape: f32[8], index: 0, kind: input, shape index: {}]
  %s1 = inlined_call_operand.hbm [shape: f32[1], index: 1, kind: output, shape index: {}]
  %s2 = sld [smem:[#allocation0]]
  $region18: #{tpu_custom_call.1} parent=0
    _
  %s4 = ssub.s32 1, %s2
  %s5 = scalar_select 0, %s4, %s2
  $region1: #{tpu_custom_call.1} parent=0
    #allocation2 [shape = 'u8[512]{0}', space=smem, size = 0x200, scoped, tag = 'input window, operand 0, single buffered']
    #allocation3 [shape = 's32[1]{0}', space=sflag, size = 0x4, scoped, tag = 'scoped memory for tpu_custom_call.1']
    #allocation4 [shape = 's32[1]{0}', space=sflag, size = 0x4, scoped, tag = 'scoped memory for tpu_custom_call.1']
    #allocation5 [shape = 'u8[512]{0}', space=smem, size = 0x200, scoped, tag = 'output window, operand 0, single buffered']
    %6 = vsyncpa [#allocation3], 0
    %7 = vsyncpa [#allocation4], 0
    // Predicated region
    $region2: #{tpu_custom_call.1} parent=1 // pred_check
      _
    $region3: #{tpu_custom_call.1} parent=1 // pred_check_branch
      %9 = sbr.rel (0) target = $region5
    $region4: #{tpu_custom_call.1} parent=1 // pred_region
      %11 = vsyncadd [#allocation3], 0
      %s13 = sshll.u32 %s0, 4
      %s14 = int_to_ptr.hbm [resolvable:$true] %s13
      %16 = dma.hbm_to_smem %s14, 16, [#allocation2], [#allocation3]
    $region5: #{tpu_custom_call.1} parent=1 // pred_fallthru
      _
    // Predicated region
    $region6: #{tpu_custom_call.1} parent=1 // pred_check
      _
    $region7: #{tpu_custom_call.1} parent=1 // pred_check_branch
      %18 = sbr.rel (0) target = $region9
    $region8: #{tpu_custom_call.1} parent=1 // pred_region
      %20 = dma.done [#allocation3], 16
    $region9: #{tpu_custom_call.1} parent=1 // pred_fallthru
      _
    %21 = sfence
    %s22 = sld [smem:[#allocation2]]
    %s23 = sld [smem:[#allocation2 + $0x4]]
    %s24 = smul.f32 %s22, %s23
    %s25 = sadd.f32 %s24, 0.0
    %s26 = sld [smem:[#allocation2 + $0x1]]
    %s27 = sld [smem:[#allocation2 + $0x5]]
    %s28 = smul.f32 %s26, %s27
    %s29 = sadd.f32 %s25, %s28
    %s30 = sld [smem:[#allocation2 + $0x2]]
    %s31 = sld [smem:[#allocation2 + $0x6]]
    %s32 = smul.f32 %s30, %s31
    %s33 = sadd.f32 %s29, %s32
    %s34 = sld [smem:[#allocation2 + $0x3]]
    %s35 = sld [smem:[#allocation2 + $0x7]]
    %s36 = smul.f32 %s34, %s35
    %s37 = sadd.f32 %s33, %s36
    %s38 = scalar_lea.smem [#allocation5], 0
    %39 = sst [smem:[%s38]] %s37
    // Predicated region
    $region10: #{tpu_custom_call.1} parent=1 // pred_check
      _
    $region11: #{tpu_custom_call.1} parent=1 // pred_check_branch
      %41 = sbr.rel (0) target = $region13
    $region12: #{tpu_custom_call.1} parent=1 // pred_region
      %43 = vsyncadd [#allocation4], 0
      %s45 = sshll.u32 %s1, 4
      %s46 = int_to_ptr.hbm [resolvable:$true] %s45
      %48 = dma.smem_to_hbm [#allocation5], 16, %s46, [#allocation4]
    $region13: #{tpu_custom_call.1} parent=1 // pred_fallthru
      _
    // Predicated region
    $region14: #{tpu_custom_call.1} parent=1 // pred_check
      _
    $region15: #{tpu_custom_call.1} parent=1 // pred_check_branch
      %50 = sbr.rel (0) target = $region17
    $region16: #{tpu_custom_call.1} parent=1 // pred_region
      %52 = dma.done [#allocation4], 16
    $region17: #{tpu_custom_call.1} parent=1 // pred_fallthru
      _
    %53 = sfence
    %54 = vsyncpa [#allocation3], 1
    %55 = vsyncpa [#allocation4], 1

</llo_original>
